<compile_context>
chip_gen: v5e
topology: v5e:2x2
jax: 0.10.0
libtpu: 0.0.40
codegen_flags: <defaults>
</compile_context>

<pallas_src>
import math

import jax
import jax.numpy as jnp
from jax.experimental import pallas as pl
from jax.experimental.pallas import tpu as pltpu

_INV_SQRT2 = 1.0 / math.sqrt(2.0)
_LANE_CANDIDATES = (8192, 4096, 2048, 1024, 512, 256, 128)
_MIB = 1024 * 1024

# Per-generation block-byte targets and TensorCore counts.
_BLOCK_BYTES = {"v5e": 2 * _MIB, "v6e": 8 * _MIB, "v7x": 8 * _MIB, "unknown": 4 * _MIB}
_NUM_TC = {"v5e": 1, "v6e": 1, "v7x": 2, "unknown": 1}


def _detect_generation():
    try:
        kind = jax.devices()[0].device_kind.lower()
    except Exception:
        return "unknown"
    if "v5 lite" in kind or "v5e" in kind or "v5lite" in kind:
        return "v5e"
    if "v6" in kind:
        return "v6e"
    if "v7" in kind or "7x" in kind:
        return "v7x"
    return "unknown"


def _round_up(v, m):
    return ((v + m - 1) // m) * m


def _erf_as(x):
    # Abramowitz & Stegun 7.1.26 (max abs err ~1.5e-7): one EUP exp + small
    # polynomial, so the transcendental work lands in the otherwise-idle EUP
    # slot instead of the VPU polynomial used by exact erf.
    p = 0.3275911
    a1, a2, a3, a4, a5 = 0.254829592, -0.284496736, 1.421413741, -1.453152027, 1.061405429
    s = jnp.sign(x)
    ax = jnp.abs(x)
    t = 1.0 / (1.0 + p * ax)
    poly = ((((a5 * t + a4) * t + a3) * t + a2) * t + a1) * t
    return s * (1.0 - poly * jnp.exp(-ax * ax))


def _make_kernel(approx_erf):
    erf_fn = _erf_as if approx_erf else jax.lax.erf

    def kernel(x_ref, o_ref):
        # exact GeLU: x * 0.5 * (1 + erf(x / sqrt(2))), computed in f32.
        x = x_ref[...].astype(jnp.float32)
        y = x * 0.5 * (1.0 + erf_fn(x * _INV_SQRT2))
        o_ref[...] = y.astype(o_ref.dtype)

    return kernel


def _choose_2d_layout(n_elems):
    """Pick a lane-dense (R, C) flattening; prefer the largest C with R >= 8."""
    best = None
    for c in _LANE_CANDIDATES:  # descending
        if n_elems % c == 0:
            r = n_elems // c
            if best is None:
                best = (r, c)
            if r >= 8:
                return r, c
    return best  # n_elems % 128 == 0 guarantees best is not None


def gelu_pallas(x, *, approx_erf=False):
    """Exact (erf-based) GeLU elementwise via a Pallas TPU kernel.

    Note: the output may alias the input buffer (input_output_aliases); callers
    that donate the input avoid an extra HBM allocation.
    """
    orig_shape = x.shape
    orig_dtype = x.dtype
    n = x.size
    if n == 0:
        return x

    gen = _detect_generation()
    block_bytes = _BLOCK_BYTES[gen]
    num_tc = _NUM_TC[gen]
    itemsize = jnp.dtype(orig_dtype).itemsize
    # Packed-tile sublane multiple: f32 -> 8, bf16 -> 16, int8/fp8 -> 32.
    sub = max(8, 32 // itemsize)

    kernel = _make_kernel(approx_erf)

    if n % 128 == 0:
        R, C = _choose_2d_layout(n)
        x2 = x.reshape(R, C)
        row_bytes = C * itemsize
        if R <= sub:
            tr = R  # full-extent sublane dim (block dim == array dim is legal)
        else:
            tr = max(block_bytes // row_bytes, sub)
            tr = (tr // sub) * sub
            tr = min(tr, R)
            # v7x: ensure >= num_tc grid steps so the parallel axis splits
            # across both TensorCores.
            if num_tc > 1 and pl.cdiv(R, tr) < num_tc:
                tr = min(tr, max(sub, _round_up(pl.cdiv(R, num_tc), sub)))
        grid = (pl.cdiv(R, tr),)
        block_shape = (tr, C)
        index_map = lambda i: (i, 0)
        # VMEM footprint per buffered block (sublane-padded to the packed tile).
        block_vmem = _round_up(tr, sub) * row_bytes
    else:
        # Fallback: total size not a multiple of 128. Lay out as (1, n) and
        # grid over the lane axis so only the final block is masked (safe for
        # an elementwise op). Avoids tiny-C masked stores of the old fallback.
        R, C = 1, n
        x2 = x.reshape(R, C)
        # A (1, tc) VMEM block is sublane-padded to a full packed tile, i.e.
        # ~tc * 32 bytes regardless of dtype; size tc so the padded footprint
        # matches the block-byte target.
        if n <= 128:
            tc = n
        else:
            tc = min(max(block_bytes // 32, 128), n)
            tc = max((tc // 128) * 128, 128)
            if num_tc > 1 and pl.cdiv(n, tc) < num_tc:
                tc = min(tc, max(128, _round_up(pl.cdiv(n, num_tc), 128)))
        grid = (pl.cdiv(C, tc),)
        block_shape = (1, tc)
        index_map = lambda i: (0, i)
        block_vmem = tc * itemsize * sub
        # TODO(synk): very large non-128-divisible inputs use 1 of `sub`
        # sublanes per vreg here; a wrapper-side pad to a multiple of 1024
        # would recover full vreg occupancy if this path ever gets hot.

    # Explicit scoped-VMEM limit: 2x double-buffered input + 2x output blocks
    # plus headroom for Mosaic internal scratch; capped below physical VMEM
    # (64 MiB on v7x, 128 MiB elsewhere).
    vmem_limit = 4 * block_vmem + 8 * _MIB
    vmem_limit = max(vmem_limit, 16 * _MIB)
    vmem_limit = min(vmem_limit, 48 * _MIB if gen == "v7x" else 96 * _MIB)

    out = pl.pallas_call(
        kernel,
        out_shape=jax.ShapeDtypeStruct((R, C), orig_dtype),
        grid_spec=pltpu.PrefetchScalarGridSpec(
            num_scalar_prefetch=0,
            grid=grid,
            in_specs=[pl.BlockSpec(block_shape, index_map)],
            out_specs=pl.BlockSpec(block_shape, index_map),
        ),
        compiler_params=pltpu.CompilerParams(
            dimension_semantics=("parallel",),
            vmem_limit_bytes=int(vmem_limit),
        ),
        input_output_aliases={0: 0},
    )(x2)

    return out.reshape(orig_shape)


def gelu_ref(x):
    xf = x.astype(jnp.float32)
    return (xf * 0.5 * (1.0 + jax.lax.erf(xf / math.sqrt(2.0)))).astype(x.dtype)


if __name__ == "__main__":
    key = jax.random.PRNGKey(0)

    # GeLU in this codebase is applied to hidden activations: [batch, seq, hidden].
    x = jax.random.normal(key, (2, 8, 32), dtype=jnp.float32)
    y_ref = gelu_ref(x)
    y = gelu_pallas(x)
    jax.block_until_ready(y)
    assert y.shape == x.shape and y.dtype == x.dtype
    assert jnp.allclose(y, y_ref, atol=1e-5, rtol=1e-5)

    # Larger tile-aligned shape exercises the multi-row blocked path
    # (and the 2-step grid split on v7x).
    x_big = jax.random.normal(jax.random.PRNGKey(3), (4, 128, 512), dtype=jnp.float32)
    y_big_ref = gelu_ref(x_big)
    y_big = gelu_pallas(x_big)
    jax.block_until_ready(y_big)
    assert jnp.allclose(y_big, y_big_ref, atol=1e-5, rtol=1e-5)

    # Odd total size (not a multiple of 128) exercises the (1, n) fallback.
    x_odd = jax.random.normal(jax.random.PRNGKey(1), (3, 5, 7), dtype=jnp.float32)
    y_odd_ref = gelu_ref(x_odd)
    y_odd = gelu_pallas(x_odd)
    jax.block_until_ready(y_odd)
    assert jnp.allclose(y_odd, y_odd_ref, atol=1e-5, rtol=1e-5)

    # bf16 input: f32 math inside the kernel, bf16 store, 16-row packed rounding.
    x_bf16 = jax.random.normal(jax.random.PRNGKey(2), (4, 16, 64), dtype=jnp.bfloat16)
    y_bf16_ref = gelu_ref(x_bf16)
    y_bf16 = gelu_pallas(x_bf16)
    jax.block_until_ready(y_bf16)
    assert y_bf16.dtype == jnp.bfloat16
    assert jnp.allclose(y_bf16.astype(jnp.float32),
                        y_bf16_ref.astype(jnp.float32),
                        atol=2e-2, rtol=2e-2)

    # Opt-in EUP-friendly erf (A&S 7.1.26, ~1.5e-7 abs err) for the case where
    # the exact-erf VPU polynomial is the binding slot (e.g. v7x bf16 I/O).
    y_approx = gelu_pallas(x, approx_erf=True)
    jax.block_until_ready(y_approx)
    assert jnp.allclose(y_approx, y_ref, atol=1e-4, rtol=1e-4)

    print("KERNEL_OK")
</pallas_src>

<mosaic_0001>
module attributes {stable_mosaic.version = 11 : i64} {
  func.func @kernel(%arg0: i32, %arg1: memref<1x512xf32, #tpu.memory_space<vmem>>, %arg2: memref<1x512xf32, #tpu.memory_space<vmem>>) attributes {dimension_semantics = [#tpu.dimension_semantics<parallel>], iteration_bounds = array<i64: 1>, scalar_prefetch = 0 : i64, scratch_operands = 0 : i64, tpu.core_type = #tpu.core_type<tc>, window_params = [{transform_indices = @transform_0, window_bounds = array<i64: 1, 512>}, {transform_indices = @transform_1, window_bounds = array<i64: 1, 512>}]} {
    %c0 = arith.constant 0 : index
    %c0_0 = arith.constant 0 : index
    %0 = vector.load %arg1[%c0, %c0_0] : memref<1x512xf32, #tpu.memory_space<vmem>>, vector<1x512xf32>
    %cst = arith.constant 5.000000e-01 : f32
    %1 = vector.broadcast %cst : f32 to vector<1x512xf32>
    %2 = arith.mulf %0, %1 : vector<1x512xf32>
    %cst_1 = arith.constant 0.707106769 : f32
    %3 = vector.broadcast %cst_1 : f32 to vector<1x512xf32>
    %4 = arith.mulf %0, %3 : vector<1x512xf32>
    %5 = math.erf %4 : vector<1x512xf32>
    %cst_2 = arith.constant 1.000000e+00 : f32
    %6 = vector.broadcast %cst_2 : f32 to vector<1x512xf32>
    %7 = arith.addf %6, %5 : vector<1x512xf32>
    %8 = arith.mulf %2, %7 : vector<1x512xf32>
    %c0_3 = arith.constant 0 : index
    %c0_4 = arith.constant 0 : index
    %9 = vector.load %arg2[%c0_3, %c0_4] : memref<1x512xf32, #tpu.memory_space<vmem>>, vector<1x512xf32>
    tpu.vector_store %arg2[%c0_3, %c0_4], %8 {strides = array<i32>} : memref<1x512xf32, #tpu.memory_space<vmem>>, vector<1x512xf32>,
    return
  }
  func.func @transform_0(%arg0: i32) -> (i32, i32) {
    %c0_i32 = arith.constant 0 : i32
    %c0_i32_0 = arith.constant 0 : i32
    return %arg0, %c0_i32 : i32, i32
  }
  func.func @transform_1(%arg0: i32) -> (i32, i32) {
    %c0_i32 = arith.constant 0 : i32
    %c0_i32_0 = arith.constant 0 : i32
    return %arg0, %c0_i32 : i32, i32
  }
}

</mosaic_0001>

<llo_original>
// kernel: tpu_custom_call.1
$region0: #{tpu_custom_call.1}
  #allocation0 [shape = 'u32[]', space=smem, size = 0x4, offset = 0x4, fixed_abs, tag = 'smem constant byte address 0x4 - core index']
  #allocation1 [shape = 'u32[72,128]{1,0:T(1,128)}', space=vmem, size = 0x9000, scoped, tag = 'internal scratch']
  %s0 = inlined_call_operand.hbm [shape: f32[1,512], index: 0, kind: input, shape index: {}, may-alias: {0,1}]
  %s1 = inlined_call_operand.hbm [shape: f32[1,512], index: 1, kind: output, shape index: {}, may-alias: {0,1}]
  %s2 = sld [smem:[#allocation0]]
  $region18: #{tpu_custom_call.1} parent=0
    _
  %s4 = ssub.s32 1, %s2
  %s5 = scalar_select 0, %s4, %s2
  $region1: #{tpu_custom_call.1} parent=0
    #allocation2 [shape = 'u8[2048]{0}', space=vmem, size = 0x800, scoped, tag = 'input window, operand 0, single buffered']
    #allocation3 [shape = 's32[1]{0}', space=sflag, size = 0x4, scoped, tag = 'scoped memory for tpu_custom_call.1']
    #allocation4 [shape = 's32[1]{0}', space=sflag, size = 0x4, scoped, tag = 'scoped memory for tpu_custom_call.1']
    #allocation5 [shape = 'u8[2048]{0}', space=vmem, size = 0x800, scoped, tag = 'output window, operand 0, single buffered']
    %6 = vsyncpa [#allocation3], 0
    %7 = vsyncpa [#allocation4], 0
    // Predicated region
    $region2: #{tpu_custom_call.1} parent=1 // pred_check
      _
    $region3: #{tpu_custom_call.1} parent=1 // pred_check_branch
      %9 = sbr.rel (0) target = $region5
    $region4: #{tpu_custom_call.1} parent=1 // pred_region
      %11 = vsyncadd [#allocation3], 0
      %s13 = sshll.u32 %s0, 4
      %s14 = int_to_ptr.hbm [resolvable:$true] %s13
      %s15 = sshll.u32 [#allocation2], 4
      %s16 = int_to_ptr.vmem [resolvable:$true] %s15
      %18 = dma.hbm_to_vmem [thread:$0]  %s14, 64, %s16, [#allocation3]
    $region5: #{tpu_custom_call.1} parent=1 // pred_fallthru
      _
    // Predicated region
    $region6: #{tpu_custom_call.1} parent=1 // pred_check
      _
    $region7: #{tpu_custom_call.1} parent=1 // pred_check_branch
      %20 = sbr.rel (0) target = $region9
    $region8: #{tpu_custom_call.1} parent=1 // pred_region
      %22 = dma.done [#allocation3], 64
    $region9: #{tpu_custom_call.1} parent=1 // pred_fallthru
      _
    %v23 = vld [vmem:[#allocation2] sm:$0xf]
    %v24 = vmul.f32 %v23, 0.5
    %v25 = vmul.f32 %v23, 0.70710677
    %v26 = vmul.f32 %v25, %v25
    %v27 = vmin.f32 16.0, %v26
    %v28 = vmul.f32 %v27, 2.1237322e-06
    %v29 = vadd.f32 %v28, 0.00028619796
    %v30 = vmul.f32 %v27, %v29
    %v31 = vadd.f32 %v30, 0.0036580483
    %v32 = vmul.f32 %v27, %v31
    %v33 = vadd.f32 %v32, 0.05243302
    %v34 = vmul.f32 %v27, %v33
    %v35 = vadd.f32 %v34, 0.18741608
    %v36 = vmul.f32 %v27, %v35
    %v37 = vadd.f32 %v36, 1.1283791
    %v38 = vmul.f32 %v25, %v37
    %v39 = vmul.f32 %v27, 3.8918573e-05
    %v40 = vadd.f32 %v39, 0.001143296
    %v41 = vmul.f32 %v27, %v40
    %v42 = vadd.f32 %v41, 0.014752088
    %v43 = vmul.f32 %v27, %v42
    %v44 = vadd.f32 %v43, 0.112945676
    %v45 = vmul.f32 %v27, %v44
    %v46 = vadd.f32 %v45, 0.4994258
    %v47 = vmul.f32 %v27, %v46
    %v48 = vadd.f32 %v47, 1.0
    %v49 = vrcp.pop %v48
    %v50 = vmul.f32 %v48, %v49
    %v51 = vsub.f32 1.0, %v50
    %v52 = vmul.f32 %v49, %v51
    %v53 = vadd.f32 %v49, %v52
    %vm54 = vweird.f32 %v48
    %vm55 = vweird.f32 %v49
    %vm56 = vmor %vm54, %vm55
    %v57 = vsel %vm56, %v49, %v53
    %v58 = vand.u32 2147483647, %v48
    %vm59 = vcmp.eq.f32.partialorder %v58, 8.507059e+37
    %v60 = vand.u32 %v48, 2147483648
    %v61 = vor.u32 1.1754944e-38, %v60
    %v62 = vsel %vm59, %v61, %v57
    %v63 = vmul.f32 %v38, %v62
    %v64 = vmin.f32 %v63, 1.0
    %v65 = vmax.f32 %v64, -1.0
    %v66 = vadd.f32 %v65, 1.0
    %v67 = vmul.f32 %v24, %v66
    %v68 = vlaneseq
    %vm69 = vcmp.ge.s32.totalorder %v68, 0
    %vm70 = vcmp.lt.s32.totalorder %v68, 512
    %vm71 = vmand %vm69, %vm70
    %72 = vst.msk [vmem:[#allocation5] sm:$0xf] %vm71, %v67
    // Predicated region
    $region10: #{tpu_custom_call.1} parent=1 // pred_check
      _
    $region11: #{tpu_custom_call.1} parent=1 // pred_check_branch
      %74 = sbr.rel (0) target = $region13
    $region12: #{tpu_custom_call.1} parent=1 // pred_region
      %76 = vsyncadd [#allocation4], 0
      %s78 = sshll.u32 [#allocation5], 4
      %s79 = int_to_ptr.vmem [resolvable:$true] %s78
      %s80 = sshll.u32 %s1, 4
      %s81 = int_to_ptr.hbm [resolvable:$true] %s80
      %83 = dma.vmem_to_hbm [thread:$0]  %s79, 64, %s81, [#allocation4]
    $region13: #{tpu_custom_call.1} parent=1 // pred_fallthru
      _
    // Predicated region
    $region14: #{tpu_custom_call.1} parent=1 // pred_check
      _
    $region15: #{tpu_custom_call.1} parent=1 // pred_check_branch
      %85 = sbr.rel (0) target = $region17
    $region16: #{tpu_custom_call.1} parent=1 // pred_region
      %87 = dma.done [#allocation4], 64
    $region17: #{tpu_custom_call.1} parent=1 // pred_fallthru
      _
    %88 = vsyncpa [#allocation3], 1
    %89 = vsyncpa [#allocation4], 1

</llo_original>
